<compile_context>
chip_gen: v6e
topology: v6e:2x2x1
jax: 0.10.0
libtpu: 0.0.40
codegen_flags: <defaults>
</compile_context>

<pallas_src>
import functools

import jax
import jax.numpy as jnp
from jax.experimental import pallas as pl
from jax.experimental.pallas import tpu as pltpu

T_PAD = 128                            # lane-dense width of logits / softmax axis
VMEM_TILE_BUDGET = 16 * 1024 * 1024    # size tiles against v5e's default scoped limit
VMEM_LIMIT_BYTES = 32 * 1024 * 1024    # raised scoped limit; safe on v5e/v6e/v7x


def _citation_query_kernel(src_ref, dst_ref, w_src_ref, w_dst_ref, b_ref, q_ref,
                           out_ref, *, num_types, embed_dim, t_pad):
    # Fused logits: two accumulating K=D MXU dots against the pre-split weight
    # halves -- identical FLOPs to the K=2D contraction, zero extra VMEM copy.
    logits = (jnp.dot(src_ref[...], w_src_ref[...],
                      preferred_element_type=jnp.float32)
              + jnp.dot(dst_ref[...], w_dst_ref[...],
                        preferred_element_type=jnp.float32)
              + b_ref[...])                                       # [TB, T_PAD]

    # Numerically stable softmax over citation types. Padded lanes carry a
    # dtype-aware large-negative bias, so exp(.) == 0 there exactly.
    m = jnp.max(logits, axis=1, keepdims=True)
    e = jnp.exp(logits - m)                                       # [TB, T_PAD]
    inv_denom = pl.reciprocal(jnp.sum(e, axis=1, keepdims=True), approx=True)

    # Tiny-T weighted combination on the VPU: T fused multiply-adds on [TB, D]
    # values instead of a mostly-zero [TB,128]x[128,D] MXU pass.
    # Scalability guard: if num_types ever grows beyond ~8-16, revert this
    # unrolled sum to a single MXU dot against a 128-row padded query table.
    if embed_dim < t_pad:
        # Deferred normalization: combine unnormalized e, then one [TB, D]
        # scale (cheaper than scaling the [TB, T_PAD] weights when D < T_PAD).
        acc = e[:, 0:1] * q_ref[0:1, :]
        for t in range(1, num_types):
            acc = acc + e[:, t:t + 1] * q_ref[t:t + 1, :]
        out_ref[...] = (acc * inv_denom).astype(out_ref.dtype)
    else:
        w = e * inv_denom
        acc = w[:, 0:1] * q_ref[0:1, :]
        for t in range(1, num_types):
            acc = acc + w[:, t:t + 1] * q_ref[t:t + 1, :]
        out_ref[...] = acc.astype(out_ref.dtype)


def prepare_citation_params(lin_w, lin_b, citation_queries, *, t_pad=T_PAD):
    """One-time parameter packing. Call when parameters are created/updated,
    NOT per forward call. Splits the Linear(2D->T) weight into src/dst halves
    (so the kernel needs no in-kernel concatenate) and pads the type axis to a
    lane-dense width with a large-negative bias on the padded logit lanes."""
    T, two_d = lin_w.shape
    D = two_d // 2
    assert two_d == 2 * D
    assert lin_b.shape == (T,) and citation_queries.shape == (T, D)
    neg_big = jnp.finfo(jnp.float32).min / 2   # safe "-inf" for softmax padding
    w_t = lin_w.astype(jnp.float32).T          # [2D, T]
    w_src = jnp.zeros((D, t_pad), jnp.float32).at[:, :T].set(w_t[:D])
    w_dst = jnp.zeros((D, t_pad), jnp.float32).at[:, :T].set(w_t[D:])
    b_pad = jnp.full((1, t_pad), neg_big, jnp.float32).at[0, :T].set(
        lin_b.astype(jnp.float32))
    q = citation_queries.astype(jnp.float32)   # [T, D] (unpadded, tiny)
    return w_src, w_dst, b_pad, q


def _round_up(x, m):
    return ((x + m - 1) // m) * m


def _choose_batch_tile(B, D, T, t_pad):
    """Biggest batch tile that fits the VMEM budget, rounded to a multiple of
    8, with a >=2-step grid for megacore sharding when the batch is large."""
    param_bytes = (2 * D * t_pad + t_pad + T * D) * 4   # single-buffered residents
    per_row_bytes = 2 * 3 * D * 4                       # double-buffered src/dst/out rows
    avail = max(VMEM_TILE_BUDGET - param_bytes, 8 * per_row_bytes)
    tb = max(8, (avail // per_row_bytes) // 8 * 8)
    if B > 256:
        # Ensure at least 2 grid steps so a v7x megacore splits the batch
        # across both TensorCores (per-step overhead is negligible here).
        tb = min(tb, _round_up(pl.cdiv(B, 2), 8))
    return min(tb, _round_up(B, 8))


def citation_type_query_generator(src_emb, dst_emb, w_src, w_dst, b_pad, q):
    """Forward pass. `w_src, w_dst, b_pad, q` come from prepare_citation_params()."""
    B, D = src_emb.shape
    assert dst_emb.shape == (B, D)
    T, t_pad = q.shape[0], w_src.shape[1]
    assert w_src.shape == (D, t_pad) and w_dst.shape == (D, t_pad)

    TB = _choose_batch_tile(B, D, T, t_pad)
    grid = (pl.cdiv(B, TB),)

    cost = pl.CostEstimate(
        flops=2 * B * (2 * D) * t_pad + 6 * B * t_pad + 2 * B * T * D + B * D,
        transcendentals=B * t_pad + B,
        bytes_accessed=4 * (2 * B * D + 2 * D * t_pad + t_pad + T * D + B * D),
    )

    kernel = functools.partial(_citation_query_kernel, num_types=T,
                               embed_dim=D, t_pad=t_pad)
    # Resident parameters: constant index map + single buffer (no need to
    # double-buffer tensors that are fetched once; frees VMEM on v7x).
    resident = functools.partial(pl.BlockSpec, pipeline_mode=pl.Buffered(1))

    return pl.pallas_call(
        kernel,
        out_shape=jax.ShapeDtypeStruct((B, D), src_emb.dtype),
        grid=grid,
        in_specs=[
            pl.BlockSpec((TB, D), lambda i: (i, 0)),        # src rows (streamed)
            pl.BlockSpec((TB, D), lambda i: (i, 0)),        # dst rows (streamed)
            resident((D, t_pad), lambda i: (0, 0)),         # W (src half), resident
            resident((D, t_pad), lambda i: (0, 0)),         # W (dst half), resident
            resident((1, t_pad), lambda i: (0, 0)),         # bias (+ pad mask), resident
            resident((T, D), lambda i: (0, 0)),             # citation queries, resident
        ],
        out_specs=pl.BlockSpec((TB, D), lambda i: (i, 0)),
        compiler_params=pltpu.CompilerParams(
            dimension_semantics=("parallel",),               # batch across v7x TCs
            vmem_limit_bytes=VMEM_LIMIT_BYTES),
        cost_estimate=cost,
    )(src_emb, dst_emb, w_src, w_dst, b_pad, q)


def _reference(src_emb, dst_emb, lin_w, lin_b, citation_queries):
    """Pure-JAX reference mirroring the PyTorch forward."""
    combined = jnp.concatenate([src_emb, dst_emb], axis=1)          # [B, 2D]
    logits = combined @ lin_w.T + lin_b                             # [B, T]
    type_weights = jax.nn.softmax(logits, axis=1)                   # [B, T]
    return type_weights @ citation_queries                          # [B, D]


if __name__ == "__main__":
    B, D, T = 8, 32, 3     # batch, embed_dim, num_citation_types

    key = jax.random.PRNGKey(0)
    k_src, k_dst, k_q, k_w, k_b = jax.random.split(key, 5)

    src_emb = jax.random.normal(k_src, (B, D), jnp.float32)
    dst_emb = jax.random.normal(k_dst, (B, D), jnp.float32)

    # Deterministic parameter init (shapes from __init__):
    #   citation_queries ~ N(0, 0.02), Linear(2D -> T) weight + bias.
    citation_queries = 0.02 * jax.random.normal(k_q, (T, D), jnp.float32)
    bound = 1.0 / (2.0 * D) ** 0.5
    lin_w = jax.random.uniform(k_w, (T, 2 * D), jnp.float32, -bound, bound)
    lin_b = jax.random.uniform(k_b, (T,), jnp.float32, -bound, bound)

    # One-time packing (outside the per-call hot path).
    packed = prepare_citation_params(lin_w, lin_b, citation_queries)
    w_src, w_dst, b_pad, q = jax.block_until_ready(packed)

    fwd = jax.jit(citation_type_query_generator)
    out = jax.block_until_ready(fwd(src_emb, dst_emb, w_src, w_dst, b_pad, q))

    ref = _reference(src_emb, dst_emb, lin_w, lin_b, citation_queries)
    assert out.shape == (B, D)
    # Slightly relaxed tolerance for the EUP approx-reciprocal in the softmax.
    assert jnp.allclose(out, ref, atol=1e-4, rtol=1e-3), "mismatch vs reference"

    print("KERNEL_OK")
</pallas_src>

<mosaic_0001>
module attributes {stable_mosaic.version = 11 : i64} {
  func.func @_citation_query_kernel(%arg0: i32, %arg1: memref<8x32xf32, #tpu.memory_space<vmem>>, %arg2: memref<8x32xf32, #tpu.memory_space<vmem>>, %arg3: memref<32x128xf32, #tpu.memory_space<vmem>>, %arg4: memref<32x128xf32, #tpu.memory_space<vmem>>, %arg5: memref<1x128xf32, #tpu.memory_space<vmem>>, %arg6: memref<3x32xf32, #tpu.memory_space<vmem>>, %arg7: memref<8x32xf32, #tpu.memory_space<vmem>>) attributes {dimension_semantics = [#tpu.dimension_semantics<parallel>], iteration_bounds = array<i64: 1>, scalar_prefetch = 0 : i64, scratch_operands = 0 : i64, tpu.core_type = #tpu.core_type<tc>, window_params = [{transform_indices = @transform_0, window_bounds = array<i64: 8, 32>}, {transform_indices = @transform_1, window_bounds = array<i64: 8, 32>}, {pipeline_mode = #tpu.pipeline_mode<synchronous>, transform_indices = @transform_2, window_bounds = array<i64: 32, 128>}, {pipeline_mode = #tpu.pipeline_mode<synchronous>, transform_indices = @transform_3, window_bounds = array<i64: 32, 128>}, {pipeline_mode = #tpu.pipeline_mode<synchronous>, transform_indices = @transform_4, window_bounds = array<i64: 1, 128>}, {pipeline_mode = #tpu.pipeline_mode<synchronous>, transform_indices = @transform_5, window_bounds = array<i64: 3, 32>}, {transform_indices = @transform_6, window_bounds = array<i64: 8, 32>}]} {
    %c0 = arith.constant 0 : index
    %c0_0 = arith.constant 0 : index
    %0 = vector.load %arg1[%c0, %c0_0] : memref<8x32xf32, #tpu.memory_space<vmem>>, vector<8x32xf32>
    %c0_1 = arith.constant 0 : index
    %c0_2 = arith.constant 0 : index
    %1 = vector.load %arg3[%c0_1, %c0_2] : memref<32x128xf32, #tpu.memory_space<vmem>>, vector<32x128xf32>
    %cst = arith.constant dense<0.000000e+00> : vector<8x128xf32>
    %2 = tpu.matmul %0, %1, %cst {dimension_numbers = #tpu.dot_dimension_numbers<[1], [0], [0], [1], [0, 0, 1, 1], [], []>} : vector<8x32xf32>, vector<32x128xf32>, vector<8x128xf32> -> vector<8x128xf32>
    %c0_3 = arith.constant 0 : index
    %c0_4 = arith.constant 0 : index
    %3 = vector.load %arg2[%c0_3, %c0_4] : memref<8x32xf32, #tpu.memory_space<vmem>>, vector<8x32xf32>
    %c0_5 = arith.constant 0 : index
    %c0_6 = arith.constant 0 : index
    %4 = vector.load %arg4[%c0_5, %c0_6] : memref<32x128xf32, #tpu.memory_space<vmem>>, vector<32x128xf32>
    %cst_7 = arith.constant dense<0.000000e+00> : vector<8x128xf32>
    %5 = tpu.matmul %3, %4, %cst_7 {dimension_numbers = #tpu.dot_dimension_numbers<[1], [0], [0], [1], [0, 0, 1, 1], [], []>} : vector<8x32xf32>, vector<32x128xf32>, vector<8x128xf32> -> vector<8x128xf32>
    %6 = arith.addf %2, %5 : vector<8x128xf32>
    %c0_8 = arith.constant 0 : index
    %c0_9 = arith.constant 0 : index
    %7 = vector.load %arg5[%c0_8, %c0_9] : memref<1x128xf32, #tpu.memory_space<vmem>>, vector<1x128xf32>
    %8 = vector.broadcast %7 : vector<1x128xf32> to vector<8x128xf32>
    %9 = arith.addf %6, %8 : vector<8x128xf32>
    %cst_10 = arith.constant dense<0xFF800000> : vector<8xf32>
    %10 = vector.multi_reduction <maximumf>, %9, %cst_10 [1] : vector<8x128xf32> to vector<8xf32>
    %11 = vector.shape_cast %10 : vector<8xf32> to vector<8x1xf32>
    %12 = vector.broadcast %11 : vector<8x1xf32> to vector<8x128xf32>
    %13 = arith.subf %9, %12 : vector<8x128xf32>
    %14 = math.exp %13 : vector<8x128xf32>
    %cst_11 = arith.constant dense<0.000000e+00> : vector<8xf32>
    %15 = vector.multi_reduction <add>, %14, %cst_11 [1] : vector<8x128xf32> to vector<8xf32>
    %16 = vector.shape_cast %15 : vector<8xf32> to vector<8x1xf32>
    %17 = tpu.reciprocal %16 {approx = true} : vector<8x1xf32> -> vector<8x1xf32>
    %18 = vector.extract_strided_slice %14 {offsets = [0, 0], sizes = [8, 1], strides = [1, 1]} : vector<8x128xf32> to vector<8x1xf32>
    %c0_12 = arith.constant 0 : index
    %c0_13 = arith.constant 0 : index
    %19 = vector.load %arg6[%c0_12, %c0_13] : memref<3x32xf32, #tpu.memory_space<vmem>>, vector<1x32xf32>
    %20 = vector.broadcast %18 : vector<8x1xf32> to vector<8x32xf32>
    %21 = vector.broadcast %19 : vector<1x32xf32> to vector<8x32xf32>
    %22 = arith.mulf %20, %21 : vector<8x32xf32>
    %23 = vector.extract_strided_slice %14 {offsets = [0, 1], sizes = [8, 1], strides = [1, 1]} : vector<8x128xf32> to vector<8x1xf32>
    %c1 = arith.constant 1 : index
    %c0_14 = arith.constant 0 : index
    %24 = vector.load %arg6[%c1, %c0_14] : memref<3x32xf32, #tpu.memory_space<vmem>>, vector<1x32xf32>
    %25 = vector.broadcast %23 : vector<8x1xf32> to vector<8x32xf32>
    %26 = vector.broadcast %24 : vector<1x32xf32> to vector<8x32xf32>
    %27 = arith.mulf %25, %26 : vector<8x32xf32>
    %28 = arith.addf %22, %27 : vector<8x32xf32>
    %29 = vector.extract_strided_slice %14 {offsets = [0, 2], sizes = [8, 1], strides = [1, 1]} : vector<8x128xf32> to vector<8x1xf32>
    %c2 = arith.constant 2 : index
    %c0_15 = arith.constant 0 : index
    %30 = vector.load %arg6[%c2, %c0_15] : memref<3x32xf32, #tpu.memory_space<vmem>>, vector<1x32xf32>
    %31 = vector.broadcast %29 : vector<8x1xf32> to vector<8x32xf32>
    %32 = vector.broadcast %30 : vector<1x32xf32> to vector<8x32xf32>
    %33 = arith.mulf %31, %32 : vector<8x32xf32>
    %34 = arith.addf %28, %33 : vector<8x32xf32>
    %35 = vector.broadcast %17 : vector<8x1xf32> to vector<8x32xf32>
    %36 = arith.mulf %34, %35 : vector<8x32xf32>
    %c0_16 = arith.constant 0 : index
    %c0_17 = arith.constant 0 : index
    %37 = vector.load %arg7[%c0_16, %c0_17] : memref<8x32xf32, #tpu.memory_space<vmem>>, vector<8x32xf32>
    tpu.vector_store %arg7[%c0_16, %c0_17], %36 {strides = array<i32>} : memref<8x32xf32, #tpu.memory_space<vmem>>, vector<8x32xf32>,
    return
  }
  func.func @transform_0(%arg0: i32) -> (i32, i32) {
    %c0_i32 = arith.constant 0 : i32
    %c0_i32_0 = arith.constant 0 : i32
    return %arg0, %c0_i32 : i32, i32
  }
  func.func @transform_1(%arg0: i32) -> (i32, i32) {
    %c0_i32 = arith.constant 0 : i32
    %c0_i32_0 = arith.constant 0 : i32
    return %arg0, %c0_i32 : i32, i32
  }
  func.func @transform_2(%arg0: i32) -> (i32, i32) {
    %c0_i32 = arith.constant 0 : i32
    %c0_i32_0 = arith.constant 0 : i32
    %c0_i32_1 = arith.constant 0 : i32
    return %c0_i32, %c0_i32_0 : i32, i32
  }
  func.func @transform_3(%arg0: i32) -> (i32, i32) {
    %c0_i32 = arith.constant 0 : i32
    %c0_i32_0 = arith.constant 0 : i32
    %c0_i32_1 = arith.constant 0 : i32
    return %c0_i32, %c0_i32_0 : i32, i32
  }
  func.func @transform_4(%arg0: i32) -> (i32, i32) {
    %c0_i32 = arith.constant 0 : i32
    %c0_i32_0 = arith.constant 0 : i32
    %c0_i32_1 = arith.constant 0 : i32
    return %c0_i32, %c0_i32_0 : i32, i32
  }
  func.func @transform_5(%arg0: i32) -> (i32, i32) {
    %c0_i32 = arith.constant 0 : i32
    %c0_i32_0 = arith.constant 0 : i32
    %c0_i32_1 = arith.constant 0 : i32
    return %c0_i32, %c0_i32_0 : i32, i32
  }
  func.func @transform_6(%arg0: i32) -> (i32, i32) {
    %c0_i32 = arith.constant 0 : i32
    %c0_i32_0 = arith.constant 0 : i32
    return %arg0, %c0_i32 : i32, i32
  }
}

</mosaic_0001>

<llo_original>
// kernel: citation_type_query_generator.1
$region0: #{citation_type_query_generator.1}
  #allocation0 [shape = 'u32[]', space=smem, size = 0x4, offset = 0x4, fixed_abs, tag = 'smem constant byte address 0x4 - core index']
  #allocation1 [shape = 'u32[144,128]{1,0:T(1,128)}', space=vmem, size = 0x12000, scoped, tag = 'internal scratch']
  %s0 = inlined_call_operand.hbm [shape: f32[8,32], index: 0, kind: input, shape index: {}]
  %s1 = inlined_call_operand.hbm [shape: f32[8,32], index: 1, kind: input, shape index: {}]
  %s2 = inlined_call_operand.hbm [shape: f32[32,128], index: 2, kind: input, shape index: {}]
  %s3 = inlined_call_operand.hbm [shape: f32[32,128], index: 3, kind: input, shape index: {}]
  %s4 = inlined_call_operand.vmem [shape: f32[1,128], index: 4, kind: input, shape index: {}]
  %s5 = inlined_call_operand.vmem [shape: f32[3,32], index: 5, kind: input, shape index: {}]
  %s6 = inlined_call_operand.hbm [shape: f32[8,32], index: 6, kind: output, shape index: {}]
  %s7 = sld [smem:[#allocation0]]
  $region50: #{citation_type_query_generator.1} parent=0
    _
  %s9 = ssub.s32 1, %s7
  %s10 = scalar_select 0, %s9, %s7
  $region1: #{citation_type_query_generator.1} parent=0
    #allocation2 [shape = 'u8[4096]{0}', space=vmem, size = 0x1000, scoped, tag = 'input window, operand 0, single buffered']
    #allocation3 [shape = 's32[1]{0}', space=sflag, size = 0x4, scoped, tag = 'scoped memory for citation_type_query_generator.1']
    #allocation4 [shape = 's32[1]{0}', space=sflag, size = 0x4, scoped, tag = 'scoped memory for citation_type_query_generator.1']
    #allocation5 [shape = 'u8[4096]{0}', space=vmem, size = 0x1000, scoped, tag = 'input window, operand 1, single buffered']
    #allocation6 [shape = 's32[1]{0}', space=sflag, size = 0x4, scoped, tag = 'scoped memory for citation_type_query_generator.1']
    #allocation7 [shape = 'u8[16384]{0}', space=vmem, size = 0x4000, scoped, tag = 'input window, operand 2, single buffered']
    #allocation8 [shape = 'u8[16384]{0}', space=vmem, size = 0x4000, scoped, tag = 'input window, operand 3, single buffered']
    #allocation9 [shape = 's32[1]{0}', space=sflag, size = 0x4, scoped, tag = 'scoped memory for citation_type_query_generator.1']
    #allocation10 [shape = 'u8[4096]{0}', space=vmem, size = 0x1000, scoped, tag = 'output window, operand 0, single buffered']
    %11 = vsyncpa [#allocation3], 0
    %12 = vsyncpa [#allocation6], 0
    %13 = vsyncpa [#allocation9], 0
    %14 = vsyncpa [#allocation4], 0
    // Predicated region
    $region2: #{citation_type_query_generator.1} parent=1 // pred_check
      _
    $region3: #{citation_type_query_generator.1} parent=1 // pred_check_branch
      %16 = sbr.rel (0) target = $region5
    $region4: #{citation_type_query_generator.1} parent=1 // pred_region
      %s18 = ssub.s32 128, 128
      %19 = vsyncadd [#allocation3], %s18
      %s21 = sshll.u32 [#allocation2], 4
      %s22 = int_to_ptr.vmem [resolvable:$true] %s21
      %24 = dma.hbm_to_vmem [thread:$0]  %s0, 128, %s22, [#allocation3]
    $region5: #{citation_type_query_generator.1} parent=1 // pred_fallthru
      _
    // Predicated region
    $region6: #{citation_type_query_generator.1} parent=1 // pred_check
      _
    $region7: #{citation_type_query_generator.1} parent=1 // pred_check_branch
      %26 = sbr.rel (0) target = $region9
    $region8: #{citation_type_query_generator.1} parent=1 // pred_region
      %s28 = ssub.s32 128, 128
      %29 = vsyncadd [#allocation6], %s28
      %s31 = sshll.u32 [#allocation5], 4
      %s32 = int_to_ptr.vmem [resolvable:$true] %s31
      %34 = dma.hbm_to_vmem [thread:$0]  %s1, 128, %s32, [#allocation6]
    $region9: #{citation_type_query_generator.1} parent=1 // pred_fallthru
      _
    // Predicated region
    $region10: #{citation_type_query_generator.1} parent=1 // pred_check
      _
    $region11: #{citation_type_query_generator.1} parent=1 // pred_check_branch
      %36 = sbr.rel (0) target = $region13
    $region12: #{citation_type_query_generator.1} parent=1 // pred_region
      %s38 = ssub.s32 512, 512
      %39 = vsyncadd [#allocation6], %s38
      %s40 = sshll.u32 [#allocation7], 4
      %s41 = int_to_ptr.vmem [resolvable:$true] %s40
      %46 = dma.hbm_to_vmem [thread:$0]  %s2, 512, %s41, [#allocation6], 128, 128, 8
    $region13: #{citation_type_query_generator.1} parent=1 // pred_fallthru
      _
    // Predicated region
    $region14: #{citation_type_query_generator.1} parent=1 // pred_check
      _
    $region15: #{citation_type_query_generator.1} parent=1 // pred_check_branch
      %48 = sbr.rel (0) target = $region17
    $region16: #{citation_type_query_generator.1} parent=1 // pred_region
      %s50 = ssub.s32 512, 512
      %51 = vsyncadd [#allocation9], %s50
      %s52 = sshll.u32 [#allocation8], 4
      %s53 = int_to_ptr.vmem [resolvable:$true] %s52
      %58 = dma.hbm_to_vmem [thread:$0]  %s3, 512, %s53, [#allocation9], 128, 128, 8
    $region17: #{citation_type_query_generator.1} parent=1 // pred_fallthru
      _
    // Predicated region
    $region18: #{citation_type_query_generator.1} parent=1 // pred_check
      _
    $region19: #{citation_type_query_generator.1} parent=1 // pred_check_branch
      %60 = sbr.rel (0) target = $region21
    $region20: #{citation_type_query_generator.1} parent=1 // pred_region
      _
    $region21: #{citation_type_query_generator.1} parent=1 // pred_fallthru
      _
    // Predicated region
    $region22: #{citation_type_query_generator.1} parent=1 // pred_check
      _
    $region23: #{citation_type_query_generator.1} parent=1 // pred_check_branch
      %62 = sbr.rel (0) target = $region25
    $region24: #{citation_type_query_generator.1} parent=1 // pred_region
      _
    $region25: #{citation_type_query_generator.1} parent=1 // pred_fallthru
      _
    // Predicated region
    $region26: #{citation_type_query_generator.1} parent=1 // pred_check
      _
    $region27: #{citation_type_query_generator.1} parent=1 // pred_check_branch
      %64 = sbr.rel (0) target = $region29
    $region28: #{citation_type_query_generator.1} parent=1 // pred_region
      %65 = dma.done [#allocation3], 128
    $region29: #{citation_type_query_generator.1} parent=1 // pred_fallthru
      _
    // Predicated region
    $region30: #{citation_type_query_generator.1} parent=1 // pred_check
      _
    $region31: #{citation_type_query_generator.1} parent=1 // pred_check_branch
      %67 = sbr.rel (0) target = $region33
    $region32: #{citation_type_query_generator.1} parent=1 // pred_region
      %68 = dma.done [#allocation6], 128
    $region33: #{citation_type_query_generator.1} parent=1 // pred_fallthru
      _
    // Predicated region
    $region34: #{citation_type_query_generator.1} parent=1 // pred_check
      _
    $region35: #{citation_type_query_generator.1} parent=1 // pred_check_branch
      %70 = sbr.rel (0) target = $region37
    $region36: #{citation_type_query_generator.1} parent=1 // pred_region
      %71 = dma.done [#allocation6], 512
    $region37: #{citation_type_query_generator.1} parent=1 // pred_fallthru
      _
    // Predicated region
    $region38: #{citation_type_query_generator.1} parent=1 // pred_check
      _
    $region39: #{citation_type_query_generator.1} parent=1 // pred_check_branch
      %73 = sbr.rel (0) target = $region41
    $region40: #{citation_type_query_generator.1} parent=1 // pred_region
      %74 = dma.done [#allocation9], 512
    $region41: #{citation_type_query_generator.1} parent=1 // pred_fallthru
      _
    %v75 = vld [vmem:[#allocation2] sm:$0xff]
    %v76 = vld [vmem:[#allocation7] sm:$0xff]
    %v77 = vld [vmem:[#allocation7 + $0x8] sm:$0xff]
    %v78 = vld [vmem:[#allocation7 + $0x10] sm:$0xff]
    %v79 = vld [vmem:[#allocation7 + $0x18] sm:$0xff]
    %v80 = vld [vmem:[#allocation5] sm:$0xff]
    %v81 = vld [vmem:[#allocation8] sm:$0xff]
    %v82 = vld [vmem:[#allocation8 + $0x8] sm:$0xff]
    %v83 = vld [vmem:[#allocation8 + $0x10] sm:$0xff]
    %v84 = vld [vmem:[#allocation8 + $0x18] sm:$0xff]
    %vm85 = vcmask 261120
    %v87 = vsel %vm85, %v80, 0
    %89 = vmatprep.subr.mxu0 0.0
    %90 = vmatpush1.msra.mxu0 0.0
    %91 = vmatprep.subr.mxu0 0.0
    %92 = vmatpush1.msra.mxu0 0.0
    %93 = vmatprep.subr.mxu0 0.0
    %94 = vmatpush1.msra.mxu0 0.0
    %95 = vmatprep.subr.mxu0 0.0
    %96 = vmatpush1.msra.mxu0 0.0
    %97 = vmatprep.subr.mxu0 0.0
    %98 = vmatpush1.msra.mxu0 0.0
    %99 = vmatprep.subr.mxu0 0.0
    %100 = vmatpush1.msra.mxu0 0.0
    %101 = vmatprep.subr.mxu0 0.0
    %102 = vmatpush1.msra.mxu0 0.0
    %103 = vmatprep.subr.mxu0 0.0
    %104 = vmatpush1.msra.mxu0 0.0
    %105 = vmatprep.subr.mxu0 0.0
    %106 = vmatpush1.msra.mxu0 0.0
    %107 = vmatprep.subr.mxu0 0.0
    %108 = vmatpush1.msra.mxu0 0.0
    %109 = vmatprep.subr.mxu0 0.0
    %110 = vmatpush1.msra.mxu0 0.0
    %111 = vmatprep.subr.mxu0 0.0
    %112 = vmatpush1.msra.mxu0 0.0
    %113 = vmatprep.subr.mxu0 0.0
    %114 = vmatpush1.msra.mxu0 %v84
    %115 = vmatprep.subr.mxu0 0.0
    %116 = vmatpush1.msra.mxu0 %v83
    %117 = vmatprep.subr.mxu0 0.0
    %118 = vmatpush1.msra.mxu0 %v82
    %119 = vmatprep.subr.mxu0 0.0
    %120 = vmatpush1.msra.mxu0 %v81
    %121 = vmatprep.subr.mxu0 0.0
    %122 = vmatpush2.msra.mxu0 0.0
    %123 = vmatprep.subr.mxu0 0.0
    %124 = vmatpush2.msra.mxu0 0.0
    %125 = vmatprep.subr.mxu0 0.0
    %126 = vmatpush2.msra.mxu0 0.0
    %127 = vmatprep.subr.mxu0 0.0
    %128 = vmatpush2.msra.mxu0 0.0
    %129 = vmatprep.subr.mxu0 0.0
    %130 = vmatpush2.msra.mxu0 0.0
    %131 = vmatprep.subr.mxu0 0.0
    %132 = vmatpush2.msra.mxu0 0.0
    %133 = vmatprep.subr.mxu0 0.0
    %134 = vmatpush2.msra.mxu0 0.0
    %135 = vmatprep.subr.mxu0 0.0
    %136 = vmatpush2.msra.mxu0 0.0
    %137 = vmatprep.subr.mxu0 0.0
    %138 = vmatpush2.msra.mxu0 0.0
    %139 = vmatprep.subr.mxu0 0.0
    %140 = vmatpush2.msra.mxu0 0.0
    %141 = vmatprep.subr.mxu0 0.0
    %142 = vmatpush2.msra.mxu0 0.0
    %143 = vmatprep.subr.mxu0 0.0
    %144 = vmatpush2.msra.mxu0 0.0
    %145 = vmatprep.subr.mxu0 0.0
    %146 = vmatpush2.msra.mxu0 0.0
    %147 = vmatprep.subr.mxu0 0.0
    %148 = vmatpush2.msra.mxu0 0.0
    %149 = vmatprep.subr.mxu0 0.0
    %150 = vmatpush2.msra.mxu0 0.0
    %151 = vmatprep.subr.mxu0 0.0
    %152 = vmatpush2.msra.mxu0 0.0
    %153 = vmatprep.mubr.f32.mxu0 0.0
    %154 = vmatmul.mubr.f32.gmra.mxu0 %v87
    %v155 = vpop.f32.mrf.mxu0
    %v156 = vadd.f32 0.0, %v155
    %v157 = vpop.f32.mrf.mxu0
    %158 = vdwg.mxu0
    %v160 = vsel %vm85, %v75, 0
    %162 = vmatprep.subr.mxu0 0.0
    %163 = vmatpush1.msra.mxu0 0.0
    %164 = vmatprep.subr.mxu0 0.0
    %165 = vmatpush1.msra.mxu0 0.0
    %166 = vmatprep.subr.mxu0 0.0
    %167 = vmatpush1.msra.mxu0 0.0
    %168 = vmatprep.subr.mxu0 0.0
    %169 = vmatpush1.msra.mxu0 0.0
    %170 = vmatprep.subr.mxu0 0.0
    %171 = vmatpush1.msra.mxu0 0.0
    %172 = vmatprep.subr.mxu0 0.0
    %173 = vmatpush1.msra.mxu0 0.0
    %174 = vmatprep.subr.mxu0 0.0
    %175 = vmatpush1.msra.mxu0 0.0
    %176 = vmatprep.subr.mxu0 0.0
    %177 = vmatpush1.msra.mxu0 0.0
    %178 = vmatprep.subr.mxu0 0.0
    %179 = vmatpush1.msra.mxu0 0.0
    %180 = vmatprep.subr.mxu0 0.0
    %181 = vmatpush1.msra.mxu0 0.0
    %182 = vmatprep.subr.mxu0 0.0
    %183 = vmatpush1.msra.mxu0 0.0
    %184 = vmatprep.subr.mxu0 0.0
    %185 = vmatpush1.msra.mxu0 0.0
    %186 = vmatprep.subr.mxu0 0.0
    %187 = vmatpush1.msra.mxu0 %v79
    %188 = vmatprep.subr.mxu0 0.0
    %189 = vmatpush1.msra.mxu0 %v78
    %190 = vmatprep.subr.mxu0 0.0
    %191 = vmatpush1.msra.mxu0 %v77
    %192 = vmatprep.subr.mxu0 0.0
    %193 = vmatpush1.msra.mxu0 %v76
    %194 = vmatprep.subr.mxu0 0.0
    %195 = vmatpush2.msra.mxu0 0.0
    %196 = vmatprep.subr.mxu0 0.0
    %197 = vmatpush2.msra.mxu0 0.0
    %198 = vmatprep.subr.mxu0 0.0
    %199 = vmatpush2.msra.mxu0 0.0
    %200 = vmatprep.subr.mxu0 0.0
    %201 = vmatpush2.msra.mxu0 0.0
    %202 = vmatprep.subr.mxu0 0.0
    %203 = vmatpush2.msra.mxu0 0.0
    %204 = vmatprep.subr.mxu0 0.0
    %205 = vmatpush2.msra.mxu0 0.0
    %206 = vmatprep.subr.mxu0 0.0
    %207 = vmatpush2.msra.mxu0 0.0
    %208 = vmatprep.subr.mxu0 0.0
    %209 = vmatpush2.msra.mxu0 0.0
    %210 = vmatprep.subr.mxu0 0.0
    %211 = vmatpush2.msra.mxu0 0.0
    %212 = vmatprep.subr.mxu0 0.0
    %213 = vmatpush2.msra.mxu0 0.0
    %214 = vmatprep.subr.mxu0 0.0
    %215 = vmatpush2.msra.mxu0 0.0
    %216 = vmatprep.subr.mxu0 0.0
    %217 = vmatpush2.msra.mxu0 0.0
    %218 = vmatprep.subr.mxu0 0.0
    %219 = vmatpush2.msra.mxu0 0.0
    %220 = vmatprep.subr.mxu0 0.0
    %221 = vmatpush2.msra.mxu0 0.0
    %222 = vmatprep.subr.mxu0 0.0
    %223 = vmatpush2.msra.mxu0 0.0
    %224 = vmatprep.subr.mxu0 0.0
    %225 = vmatpush2.msra.mxu0 0.0
    %226 = vmatprep.mubr.f32.mxu0 0.0
    %227 = vmatmul.mubr.f32.gmra.mxu0 %v160
    %v228 = vpop.f32.mrf.mxu0
    %v229 = vadd.f32 %v156, %v228
    %v230 = vpop.f32.mrf.mxu0
    %231 = vdwg.mxu0
    %v232 = vld [vmem:[%s4] sm:$0x1]
    %v234 = vlaneseq
    %v235 = vshrl.u32 %v234, 7
    %v236 = vsub.s32 0, %v235
    %v237 = vrot.slane %v232, %v236
    %v239 = vadd.f32 %v229, %v237
    %240 = vmax.xlane.f32.xlu0 %v239
    %v241 = vpop.xlane.xlu0 %240
    %v242 = vsub.f32 %v239, %v241
    %v243 = vmul.f32 %v242, 1.442695
    %v244 = vpow.pop %v243
    %245 = vadd.xlane.f32.xlu0 %v244
    %v246 = vpop.xlane.xlu0 %245
    %v247 = vrcp.pop %v246
    %v248 = vld [vmem:[%s5] sm:$0x1]
    %250 = vset.pattern.permute.xlu0 0
    %251 = vperm.xlu0 %250, %v244
    %v252 = vpop.permute.xlu0 %251
    %v254 = vlaneseq
    %v255 = vshrl.u32 %v254, 7
    %v256 = vsub.s32 0, %v255
    %v257 = vrot.slane %v248, %v256
    %v258 = vmul.f32 %v252, %v257
    %v259 = vld [vmem:[%s5 + $0x1] sm:$0x1]
    %260 = vset.pattern.permute.xlu0 1
    %261 = vperm.xlu0 %260, %v244
    %v262 = vpop.permute.xlu0 %261
    %v264 = vlaneseq
    %v265 = vshrl.u32 %v264, 7
    %v266 = vsub.s32 0, %v265
    %v267 = vrot.slane %v259, %v266
    %v268 = vmul.f32 %v262, %v267
    %v269 = vadd.f32 %v258, %v268
    %v270 = vld [vmem:[%s5 + $0x2] sm:$0x1]
    %271 = vset.pattern.permute.xlu0 2
    %272 = vperm.xlu0 %271, %v244
    %v273 = vpop.permute.xlu0 %272
    %v275 = vlaneseq
    %v276 = vshrl.u32 %v275, 7
    %v277 = vsub.s32 0, %v276
    %v278 = vrot.slane %v270, %v277
    %v279 = vmul.f32 %v273, %v278
    %v280 = vadd.f32 %v269, %v279
    %v281 = vmul.f32 %v280, %v247
    %282 = vst.msk [vmem:[#allocation10] sm:$0xff] %vm85, %v281
    // Predicated region
    $region42: #{citation_type_query_generator.1} parent=1 // pred_check
      _
    $region43: #{citation_type_query_generator.1} parent=1 // pred_check_branch
      %284 = sbr.rel (0) target = $region45
    $region44: #{citation_type_query_generator.1} parent=1 // pred_region
      %s286 = ssub.s32 128, 128
      %287 = vsyncadd [#allocation4], %s286
      %s289 = sshll.u32 [#allocation10], 4
      %s290 = int_to_ptr.vmem [resolvable:$true] %s289
      %292 = dma.vmem_to_hbm [thread:$0]  %s290, 128, %s6, [#allocation4]
    $region45: #{citation_type_query_generator.1} parent=1 // pred_fallthru
      _
    // Predicated region
    $region46: #{citation_type_query_generator.1} parent=1 // pred_check
      _
    $region47: #{citation_type_query_generator.1} parent=1 // pred_check_branch
      %294 = sbr.rel (0) target = $region49
    $region48: #{citation_type_query_generator.1} parent=1 // pred_region
      %295 = dma.done [#allocation4], 128
    $region49: #{citation_type_query_generator.1} parent=1 // pred_fallthru
      _
    %296 = vsyncpa [#allocation3], 1
    %297 = vsyncpa [#allocation6], 1
    %298 = vsyncpa [#allocation9], 1
    %299 = vsyncpa [#allocation4], 1

</llo_original>
